<compile_context>
chip_gen: v7x
topology: tpu7x:2x2x1
jax: 0.10.0
libtpu: 0.0.40
codegen_flags: <defaults>
</compile_context>

<pallas_src>
import functools

import jax
import jax.numpy as jnp
import numpy as np
from jax import lax
from jax.experimental import pallas as pl
from jax.experimental.pallas import tpu as pltpu

_EPS = 1e-12  # matches torch.nn.functional.normalize default eps


def _l2_normalize(x):
    x = x.astype(jnp.float32)
    nrm = jnp.sqrt(jnp.sum(x * x, axis=-1, keepdims=True))
    return x / jnp.maximum(nrm, _EPS)


# ----------------------------- kernel bodies -------------------------------
def _infonce_self_kernel(q_ref, p_ref, keys_ref, out_ref, *, inv_temperature):
    """negative_keys is None: softmax over all (pre-normalized, bf16, resident)
    positive keys; label == row index."""
    q = _l2_normalize(q_ref[...]) * inv_temperature          # (tq, D) f32
    p = _l2_normalize(p_ref[...])                             # (tq, D) f32
    # positive logit: row-wise f32 dot (temperature already folded into q)
    pos = jnp.sum(q * p, axis=-1, keepdims=True)              # (tq, 1)
    # full logits on the MXU: bf16 inputs / f32 accumulation, no transpose
    logits = lax.dot_general(
        q.astype(jnp.bfloat16), keys_ref[...],
        dimension_numbers=(((1,), (1,)), ((), ())),
        preferred_element_type=jnp.float32)                   # (tq, Nk)
    m = jnp.max(logits, axis=-1, keepdims=True)
    lse = m + jnp.log(jnp.sum(jnp.exp(logits - m), axis=-1, keepdims=True))
    out_ref[...] = lse - pos


def _infonce_unpaired_kernel(q_ref, p_ref, neg_keys_ref, out_ref, *,
                             inv_temperature):
    """'unpaired' negatives: label is class 0 (the positive), which is folded
    analytically into the LSE (no lane-misaligned concatenate)."""
    q = _l2_normalize(q_ref[...]) * inv_temperature           # (tq, D) f32
    p = _l2_normalize(p_ref[...])
    pos = jnp.sum(q * p, axis=-1, keepdims=True)               # (tq, 1) f32
    neg = lax.dot_general(
        q.astype(jnp.bfloat16), neg_keys_ref[...],
        dimension_numbers=(((1,), (1,)), ((), ())),
        preferred_element_type=jnp.float32)                    # (tq, M)
    m = jnp.maximum(pos, jnp.max(neg, axis=-1, keepdims=True))
    denom = jnp.exp(pos - m) + jnp.sum(jnp.exp(neg - m), axis=-1, keepdims=True)
    out_ref[...] = m + jnp.log(denom) - pos


def _infonce_paired_kernel(q_ref, p_ref, neg_ref, out_ref, *, inv_temperature):
    """'paired' negatives: (tq, M, D) negatives tiled along the query axis,
    per-row dots on the VPU in f32 (M is typically small)."""
    q = _l2_normalize(q_ref[...]) * inv_temperature
    p = _l2_normalize(p_ref[...])
    nk = _l2_normalize(neg_ref[...])                           # (tq, M, D)
    pos = jnp.sum(q * p, axis=-1, keepdims=True)
    neg = jnp.sum(q[:, None, :] * nk, axis=-1)                 # (tq, M)
    m = jnp.maximum(pos, jnp.max(neg, axis=-1, keepdims=True))
    denom = jnp.exp(pos - m) + jnp.sum(jnp.exp(neg - m), axis=-1, keepdims=True)
    out_ref[...] = m + jnp.log(denom) - pos


# ------------------------------- wrapper ------------------------------------
def _round_up(x, m):
    return ((x + m - 1) // m) * m


def _vmem_limit_bytes(*buffer_bytes):
    # double-buffer everything + 4 MiB headroom; clamp for v7x (64 MiB phys)
    est = 2 * int(sum(buffer_bytes)) + (4 << 20)
    return int(min(max(est, 32 << 20), 48 << 20))


def info_nce_pallas(query, positive_key, negative_keys=None, *,
                    temperature=0.1, reduction="mean",
                    negative_mode="unpaired", max_tile_q=256):
    # --- validation identical to the PyTorch reference ---------------------
    if query.ndim != 2:
        raise ValueError("<query> must have 2 dimensions.")
    if positive_key.ndim != 2:
        raise ValueError("<positive_key> must have 2 dimensions.")
    if negative_keys is not None:
        if negative_mode == "unpaired" and negative_keys.ndim != 2:
            raise ValueError("<negative_keys> must have 2 dimensions if "
                             "<negative_mode> == 'unpaired'.")
        if negative_mode == "paired" and negative_keys.ndim != 3:
            raise ValueError("<negative_keys> must have 3 dimensions if "
                             "<negative_mode> == 'paired'.")
        if negative_mode == "paired" and len(query) != len(negative_keys):
            raise ValueError("paired negatives must match query batch size.")
        if query.shape[-1] != negative_keys.shape[-1]:
            raise ValueError("query / negative_keys dim mismatch.")
    if len(query) != len(positive_key):
        raise ValueError("<query> and <positive_key> must have the same "
                         "number of samples.")
    if query.shape[-1] != positive_key.shape[-1]:
        raise ValueError("query / positive_key dim mismatch.")

    n, d = query.shape
    inv_t = 1.0 / float(temperature)

    # ------ query-axis tiling (1-D parallel grid) --------------------------
    if n <= max_tile_q:
        tile_q = n                         # single tile == full dim
    else:
        tile_q = max(8, (max_tile_q // 8) * 8)
    n_pad = _round_up(n, tile_q)
    grid = (n_pad // tile_q,)

    def _pad_rows(x):
        if n_pad == n:
            return x
        pad = [(0, n_pad - n)] + [(0, 0)] * (x.ndim - 1)
        return jnp.pad(x, pad)

    q_pad = _pad_rows(query.astype(jnp.float32))
    p_pad = _pad_rows(positive_key.astype(jnp.float32))

    q_spec = pl.BlockSpec((tile_q, d), lambda i: (i, 0))
    out_spec = pl.BlockSpec((tile_q, 1), lambda i: (i, 0))
    out_shape = jax.ShapeDtypeStruct((n_pad, 1), jnp.float32)

    tile_bytes = 2 * tile_q * d * 4 + tile_q * 4       # q tile + p tile + out

    if negative_keys is None:
        # pre-normalize the resident key slab ONCE, keep it bf16
        keys = _l2_normalize(positive_key).astype(jnp.bfloat16)     # (n, d)
        keys_spec = pl.BlockSpec((n, d), lambda i: (0, 0))
        vmem = _vmem_limit_bytes(tile_bytes, n * d * 2, tile_q * n * 4)
        kern = functools.partial(_infonce_self_kernel, inv_temperature=inv_t)
        losses = pl.pallas_call(
            kern,
            out_shape=out_shape,
            grid=grid,
            in_specs=[q_spec, q_spec, keys_spec],
            out_specs=out_spec,
            compiler_params=pltpu.CompilerParams(
                dimension_semantics=("parallel",),
                vmem_limit_bytes=vmem),
        )(q_pad, p_pad, keys)
    elif negative_mode == "unpaired":
        m_neg = negative_keys.shape[0]
        keys = _l2_normalize(negative_keys).astype(jnp.bfloat16)    # (M, d)
        keys_spec = pl.BlockSpec((m_neg, d), lambda i: (0, 0))
        vmem = _vmem_limit_bytes(tile_bytes, m_neg * d * 2, tile_q * m_neg * 4)
        kern = functools.partial(_infonce_unpaired_kernel,
                                 inv_temperature=inv_t)
        losses = pl.pallas_call(
            kern,
            out_shape=out_shape,
            grid=grid,
            in_specs=[q_spec, q_spec, keys_spec],
            out_specs=out_spec,
            compiler_params=pltpu.CompilerParams(
                dimension_semantics=("parallel",),
                vmem_limit_bytes=vmem),
        )(q_pad, p_pad, keys)
    else:  # 'paired'
        m_neg = negative_keys.shape[1]
        nk_pad = _pad_rows(negative_keys.astype(jnp.float32))
        nk_spec = pl.BlockSpec((tile_q, m_neg, d), lambda i: (i, 0, 0))
        vmem = _vmem_limit_bytes(tile_bytes, tile_q * m_neg * d * 4,
                                 tile_q * m_neg * 4)
        kern = functools.partial(_infonce_paired_kernel, inv_temperature=inv_t)
        losses = pl.pallas_call(
            kern,
            out_shape=out_shape,
            grid=grid,
            in_specs=[q_spec, q_spec, nk_spec],
            out_specs=out_spec,
            compiler_params=pltpu.CompilerParams(
                dimension_semantics=("parallel",),
                vmem_limit_bytes=vmem),
        )(q_pad, p_pad, nk_pad)

    per_sample = losses[:n, 0]
    if reduction == "none":
        return per_sample
    if reduction == "sum":
        return jnp.sum(per_sample)
    return jnp.mean(per_sample)


class InfoNCE:
    """Drop-in equivalent of the PyTorch InfoNCE module (forward only)."""

    def __init__(self, temperature=0.1, reduction="mean",
                 negative_mode="unpaired"):
        self.temperature = temperature
        self.reduction = reduction
        self.negative_mode = negative_mode

    def __call__(self, query, positive_key, negative_keys=None):
        return info_nce_pallas(query, positive_key, negative_keys,
                               temperature=self.temperature,
                               reduction=self.reduction,
                               negative_mode=self.negative_mode)


# ----------------------- pure-JAX references for checking -------------------
def _info_nce_f32_ref(query, positive_key, negative_keys=None, *,
                      temperature=0.1, negative_mode="unpaired"):
    """Plain f32 PyTorch-semantics reference; returns per-sample losses."""
    qn = _l2_normalize(query)
    pn = _l2_normalize(positive_key)
    if negative_keys is not None:
        nkn = _l2_normalize(negative_keys)
        pos = jnp.sum(qn * pn, axis=-1, keepdims=True)
        if negative_mode == "unpaired":
            neg = qn @ nkn.T
        else:
            neg = jnp.einsum("nd,nmd->nm", qn, nkn)
        logits = jnp.concatenate([pos, neg], axis=-1) / temperature
        labels = jnp.zeros((logits.shape[0],), dtype=jnp.int32)
    else:
        logits = (qn @ pn.T) / temperature
        labels = jnp.arange(logits.shape[0])
    logp = jax.nn.log_softmax(logits, axis=-1)
    return -jnp.take_along_axis(logp, labels[:, None], axis=1)[:, 0]


def _info_nce_mirror_ref(query, positive_key, negative_keys=None, *,
                         temperature=0.1, negative_mode="unpaired"):
    """Mirrors the kernel's numerics (bf16 matmul, f32 positive, folded LSE)."""
    inv_t = 1.0 / float(temperature)
    q = _l2_normalize(query) * inv_t
    p = _l2_normalize(positive_key)
    pos = jnp.sum(q * p, axis=-1, keepdims=True)
    if negative_keys is None:
        logits = lax.dot_general(q.astype(jnp.bfloat16), p.astype(jnp.bfloat16),
                                 dimension_numbers=(((1,), (1,)), ((), ())),
                                 preferred_element_type=jnp.float32)
        m = jnp.max(logits, axis=-1, keepdims=True)
        lse = m + jnp.log(jnp.sum(jnp.exp(logits - m), axis=-1, keepdims=True))
        return (lse - pos)[:, 0]
    if negative_mode == "unpaired":
        keys = _l2_normalize(negative_keys).astype(jnp.bfloat16)
        neg = lax.dot_general(q.astype(jnp.bfloat16), keys,
                              dimension_numbers=(((1,), (1,)), ((), ())),
                              preferred_element_type=jnp.float32)
    else:
        nk = _l2_normalize(negative_keys)
        neg = jnp.sum(q[:, None, :] * nk, axis=-1)
    m = jnp.maximum(pos, jnp.max(neg, axis=-1, keepdims=True))
    lse = m + jnp.log(jnp.exp(pos - m) +
                      jnp.sum(jnp.exp(neg - m), axis=-1, keepdims=True))
    return (lse - pos)[:, 0]


if __name__ == "__main__":
    key = jax.random.PRNGKey(0)
    kq, kp, kn, kn3 = jax.random.split(key, 4)

    # SMALL shapes: batch=8, dim=32, negatives=16
    N, D, M = 8, 32, 16
    query = jax.random.normal(kq, (N, D), dtype=jnp.float32)
    positive_key = jax.random.normal(kp, (N, D), dtype=jnp.float32)
    neg_unpaired = jax.random.normal(kn, (M, D), dtype=jnp.float32)
    neg_paired = jax.random.normal(kn3, (N, M, D), dtype=jnp.float32)

    def _reduce(per, reduction):
        if reduction == "none":
            return per
        if reduction == "sum":
            return jnp.sum(per)
        return jnp.mean(per)

    def check(name, q, p, nk, negative_mode, reduction, max_tile_q=256):
        got = jax.block_until_ready(
            info_nce_pallas(q, p, nk, temperature=0.1, reduction=reduction,
                            negative_mode=negative_mode,
                            max_tile_q=max_tile_q))
        per_mirror = _info_nce_mirror_ref(q, p, nk, temperature=0.1,
                                          negative_mode=negative_mode)
        per_f32 = _info_nce_f32_ref(q, p, nk, temperature=0.1,
                                    negative_mode=negative_mode)
        np.testing.assert_allclose(
            np.asarray(got), np.asarray(_reduce(per_mirror, reduction)),
            rtol=1e-3, atol=1e-3, err_msg=name + " (mirror)")
        np.testing.assert_allclose(
            np.asarray(got), np.asarray(_reduce(per_f32, reduction)),
            rtol=5e-2, atol=5e-2, err_msg=name + " (f32 semantics)")

    # run the module once (as in the original usage)
    module = InfoNCE(temperature=0.1, reduction="mean",
                     negative_mode="unpaired")
    _ = jax.block_until_ready(module(query, positive_key, neg_unpaired))
    _ = jax.block_until_ready(module(query, positive_key))

    # single-tile path
    check("self/mean", query, positive_key, None, "unpaired", "mean")
    check("self/none", query, positive_key, None, "unpaired", "none")
    check("unpaired/mean", query, positive_key, neg_unpaired, "unpaired", "mean")
    check("unpaired/sum", query, positive_key, neg_unpaired, "unpaired", "sum")
    check("paired/mean", query, positive_key, neg_paired, "paired", "mean")

    # multi-tile + padding path (grid > 1, N not a multiple of the tile)
    N2 = 40
    q2 = jax.random.normal(jax.random.fold_in(key, 1), (N2, D), jnp.float32)
    p2 = jax.random.normal(jax.random.fold_in(key, 2), (N2, D), jnp.float32)
    nk2 = jax.random.normal(jax.random.fold_in(key, 3), (M, D), jnp.float32)
    nkp2 = jax.random.normal(jax.random.fold_in(key, 4), (N2, M, D), jnp.float32)
    check("self/tiled", q2, p2, None, "unpaired", "mean", max_tile_q=16)
    check("unpaired/tiled", q2, p2, nk2, "unpaired", "mean", max_tile_q=16)
    check("paired/tiled", q2, p2, nkp2, "paired", "mean", max_tile_q=16)

    print("KERNEL_OK")
</pallas_src>

<mosaic_0001>
module attributes {stable_mosaic.version = 11 : i64} {
  func.func @_infonce_unpaired_kernel(%arg0: i32, %arg1: memref<8x32xf32, #tpu.memory_space<vmem>>, %arg2: memref<8x32xf32, #tpu.memory_space<vmem>>, %arg3: memref<16x32xbf16, #tpu.memory_space<vmem>>, %arg4: memref<8x1xf32, #tpu.memory_space<vmem>>) attributes {dimension_semantics = [#tpu.dimension_semantics<parallel>], iteration_bounds = array<i64: 1>, scalar_prefetch = 0 : i64, scratch_operands = 0 : i64, tpu.core_type = #tpu.core_type<tc>, window_params = [{transform_indices = @transform_0, window_bounds = array<i64: 8, 32>}, {transform_indices = @transform_1, window_bounds = array<i64: 8, 32>}, {pipeline_mode = #tpu.pipeline_mode<synchronous>, transform_indices = @transform_2, window_bounds = array<i64: 16, 32>}, {transform_indices = @transform_3, window_bounds = array<i64: 8, 1>}]} {
    %c0 = arith.constant 0 : index
    %c0_0 = arith.constant 0 : index
    %0 = vector.load %arg1[%c0, %c0_0] : memref<8x32xf32, #tpu.memory_space<vmem>>, vector<8x32xf32>
    %1 = arith.mulf %0, %0 : vector<8x32xf32>
    %cst = arith.constant dense<0.000000e+00> : vector<8xf32>
    %2 = vector.multi_reduction <add>, %1, %cst [1] : vector<8x32xf32> to vector<8xf32>
    %3 = vector.shape_cast %2 : vector<8xf32> to vector<8x1xf32>
    %4 = math.sqrt %3 : vector<8x1xf32>
    %cst_1 = arith.constant 9.99999996E-13 : f32
    %5 = vector.broadcast %cst_1 : f32 to vector<8x1xf32>
    %6 = arith.maximumf %4, %5 : vector<8x1xf32>
    %7 = vector.broadcast %6 : vector<8x1xf32> to vector<8x32xf32>
    %8 = arith.divf %0, %7 : vector<8x32xf32>
    %cst_2 = arith.constant 1.000000e+01 : f32
    %9 = vector.broadcast %cst_2 : f32 to vector<8x32xf32>
    %10 = arith.mulf %8, %9 : vector<8x32xf32>
    %c0_3 = arith.constant 0 : index
    %c0_4 = arith.constant 0 : index
    %11 = vector.load %arg2[%c0_3, %c0_4] : memref<8x32xf32, #tpu.memory_space<vmem>>, vector<8x32xf32>
    %12 = arith.mulf %11, %11 : vector<8x32xf32>
    %cst_5 = arith.constant dense<0.000000e+00> : vector<8xf32>
    %13 = vector.multi_reduction <add>, %12, %cst_5 [1] : vector<8x32xf32> to vector<8xf32>
    %14 = vector.shape_cast %13 : vector<8xf32> to vector<8x1xf32>
    %15 = math.sqrt %14 : vector<8x1xf32>
    %cst_6 = arith.constant 9.99999996E-13 : f32
    %16 = vector.broadcast %cst_6 : f32 to vector<8x1xf32>
    %17 = arith.maximumf %15, %16 : vector<8x1xf32>
    %18 = vector.broadcast %17 : vector<8x1xf32> to vector<8x32xf32>
    %19 = arith.divf %11, %18 : vector<8x32xf32>
    %20 = arith.mulf %10, %19 : vector<8x32xf32>
    %cst_7 = arith.constant dense<0.000000e+00> : vector<8xf32>
    %21 = vector.multi_reduction <add>, %20, %cst_7 [1] : vector<8x32xf32> to vector<8xf32>
    %22 = vector.shape_cast %21 : vector<8xf32> to vector<8x1xf32>
    %23 = arith.truncf %10 : vector<8x32xf32> to vector<8x32xbf16>
    %c0_8 = arith.constant 0 : index
    %c0_9 = arith.constant 0 : index
    %24 = vector.load %arg3[%c0_8, %c0_9] : memref<16x32xbf16, #tpu.memory_space<vmem>>, vector<16x32xbf16>
    %cst_10 = arith.constant dense<0.000000e+00> : vector<8x16xf32>
    %25 = tpu.matmul %23, %24, %cst_10 {dimension_numbers = #tpu.dot_dimension_numbers<[1], [1], [0], [0], [0, 0, 1, 0], [], []>} : vector<8x32xbf16>, vector<16x32xbf16>, vector<8x16xf32> -> vector<8x16xf32>
    %cst_11 = arith.constant dense<0xFF800000> : vector<8xf32>
    %26 = vector.multi_reduction <maximumf>, %25, %cst_11 [1] : vector<8x16xf32> to vector<8xf32>
    %27 = vector.shape_cast %26 : vector<8xf32> to vector<8x1xf32>
    %28 = arith.maximumf %22, %27 : vector<8x1xf32>
    %29 = arith.subf %22, %28 : vector<8x1xf32>
    %30 = math.exp %29 : vector<8x1xf32>
    %31 = vector.broadcast %28 : vector<8x1xf32> to vector<8x16xf32>
    %32 = arith.subf %25, %31 : vector<8x16xf32>
    %33 = math.exp %32 : vector<8x16xf32>
    %cst_12 = arith.constant dense<0.000000e+00> : vector<8xf32>
    %34 = vector.multi_reduction <add>, %33, %cst_12 [1] : vector<8x16xf32> to vector<8xf32>
    %35 = vector.shape_cast %34 : vector<8xf32> to vector<8x1xf32>
    %36 = arith.addf %30, %35 : vector<8x1xf32>
    %37 = math.log %36 : vector<8x1xf32>
    %38 = arith.addf %28, %37 : vector<8x1xf32>
    %39 = arith.subf %38, %22 : vector<8x1xf32>
    %c0_13 = arith.constant 0 : index
    %c0_14 = arith.constant 0 : index
    %40 = vector.load %arg4[%c0_13, %c0_14] : memref<8x1xf32, #tpu.memory_space<vmem>>, vector<8x1xf32>
    tpu.vector_store %arg4[%c0_13, %c0_14], %39 {strides = array<i32>} : memref<8x1xf32, #tpu.memory_space<vmem>>, vector<8x1xf32>,
    return
  }
  func.func @transform_0(%arg0: i32) -> (i32, i32) {
    %c0_i32 = arith.constant 0 : i32
    %c0_i32_0 = arith.constant 0 : i32
    return %arg0, %c0_i32 : i32, i32
  }
  func.func @transform_1(%arg0: i32) -> (i32, i32) {
    %c0_i32 = arith.constant 0 : i32
    %c0_i32_0 = arith.constant 0 : i32
    return %arg0, %c0_i32 : i32, i32
  }
  func.func @transform_2(%arg0: i32) -> (i32, i32) {
    %c0_i32 = arith.constant 0 : i32
    %c0_i32_0 = arith.constant 0 : i32
    %c0_i32_1 = arith.constant 0 : i32
    return %c0_i32, %c0_i32_0 : i32, i32
  }
  func.func @transform_3(%arg0: i32) -> (i32, i32) {
    %c0_i32 = arith.constant 0 : i32
    %c0_i32_0 = arith.constant 0 : i32
    return %arg0, %c0_i32 : i32, i32
  }
}

</mosaic_0001>

<llo_original>
// kernel: tpu_custom_call.1
$region0: #{tpu_custom_call.1}
  #allocation0 [shape = 'u32[]', space=smem, size = 0x4, offset = 0x4, fixed_abs, tag = 'smem constant byte address 0x4 - core index']
  #allocation1 [shape = 'u32[144,128]{1,0:T(1,128)}', space=vmem, size = 0x12000, scoped, tag = 'internal scratch']
  %s0 = inlined_call_operand.hbm [shape: f32[8,32], index: 0, kind: input, shape index: {}]
  %s1 = inlined_call_operand.hbm [shape: f32[8,32], index: 1, kind: input, shape index: {}]
  %s2 = inlined_call_operand.hbm [shape: bf16[16,32], index: 2, kind: input, shape index: {}]
  %s3 = inlined_call_operand.vmem [shape: f32[8,1], index: 3, kind: output, shape index: {}]
  %s4 = sld [smem:[#allocation0]]
  $region34: #{tpu_custom_call.1} parent=0
    _
  %s6 = ssub.s32 1, %s4
  %s7 = scalar_select 0, %s6, %s4
  $region1: #{tpu_custom_call.1} parent=0
    #allocation2 [shape = 'u8[4096]{0}', space=vmem, size = 0x1000, scoped, tag = 'input window, operand 0, single buffered']
    #allocation3 [shape = 's32[1]{0}', space=sflag, size = 0x4, scoped, tag = 'scoped memory for tpu_custom_call.1']
    #allocation4 [shape = 'u8[4096]{0}', space=vmem, size = 0x1000, scoped, tag = 'input window, operand 1, single buffered']
    #allocation5 [shape = 's32[1]{0}', space=sflag, size = 0x4, scoped, tag = 'scoped memory for tpu_custom_call.1']
    #allocation6 [shape = 'u8[4096]{0}', space=vmem, size = 0x1000, scoped, tag = 'input window, operand 2, single buffered']
    %8 = vsyncpa [#allocation3], 0
    %9 = vsyncpa [#allocation5], 0
    // Predicated region
    $region2: #{tpu_custom_call.1} parent=1 // pred_check
      _
    $region3: #{tpu_custom_call.1} parent=1 // pred_check_branch
      %11 = sbr.rel (0) target = $region5
    $region4: #{tpu_custom_call.1} parent=1 // pred_region
      %s13 = ssub.s32 128, 128
      %14 = vsyncadd [#allocation3], %s13
      %s16 = sshll.u32 [#allocation2], 4
      %s17 = int_to_ptr.vmem [resolvable:$true] %s16
      %19 = dma.hbm_to_vmem [thread:$0]  %s0, 128, %s17, [#allocation3]
    $region5: #{tpu_custom_call.1} parent=1 // pred_fallthru
      _
    // Predicated region
    $region6: #{tpu_custom_call.1} parent=1 // pred_check
      _
    $region7: #{tpu_custom_call.1} parent=1 // pred_check_branch
      %21 = sbr.rel (0) target = $region9
    $region8: #{tpu_custom_call.1} parent=1 // pred_region
      %s23 = ssub.s32 128, 128
      %24 = vsyncadd [#allocation5], %s23
      %s26 = sshll.u32 [#allocation4], 4
      %s27 = int_to_ptr.vmem [resolvable:$true] %s26
      %29 = dma.hbm_to_vmem [thread:$0]  %s1, 128, %s27, [#allocation5]
    $region9: #{tpu_custom_call.1} parent=1 // pred_fallthru
      _
    // Predicated region
    $region10: #{tpu_custom_call.1} parent=1 // pred_check
      _
    $region11: #{tpu_custom_call.1} parent=1 // pred_check_branch
      %31 = sbr.rel (0) target = $region13
    $region12: #{tpu_custom_call.1} parent=1 // pred_region
      %s33 = ssub.s32 128, 128
      %34 = vsyncadd [#allocation5], %s33
      %s35 = sshll.u32 [#allocation6], 4
      %s36 = int_to_ptr.vmem [resolvable:$true] %s35
      %41 = dma.hbm_to_vmem [thread:$0]  %s2, 128, %s36, [#allocation5], 64, 64, 4
    $region13: #{tpu_custom_call.1} parent=1 // pred_fallthru
      _
    // Predicated region
    $region14: #{tpu_custom_call.1} parent=1 // pred_check
      _
    $region15: #{tpu_custom_call.1} parent=1 // pred_check_branch
      %43 = sbr.rel (0) target = $region17
    $region16: #{tpu_custom_call.1} parent=1 // pred_region
      %44 = dma.done [#allocation3], 128
    $region17: #{tpu_custom_call.1} parent=1 // pred_fallthru
      _
    // Predicated region
    $region18: #{tpu_custom_call.1} parent=1 // pred_check
      _
    $region19: #{tpu_custom_call.1} parent=1 // pred_check_branch
      %46 = sbr.rel (0) target = $region21
    $region20: #{tpu_custom_call.1} parent=1 // pred_region
      %47 = dma.done [#allocation5], 128
    $region21: #{tpu_custom_call.1} parent=1 // pred_fallthru
      _
    // Predicated region
    $region22: #{tpu_custom_call.1} parent=1 // pred_check
      _
    $region23: #{tpu_custom_call.1} parent=1 // pred_check_branch
      %49 = sbr.rel (0) target = $region25
    $region24: #{tpu_custom_call.1} parent=1 // pred_region
      %50 = dma.done [#allocation5], 128
    $region25: #{tpu_custom_call.1} parent=1 // pred_fallthru
      _
    %v52 = vld [vmem:[#allocation2] sm:$0xff]
    %v53 = vmul.f32 %v52, %v52
    %vm54 = vcmask 261120
    %v55 = vsel %vm54, %v53, 0.0
    %56 = vadd.xlane.f32.xlu0 %v55
    %v57 = vpop.xlane.xlu0 %56
    %v58 = vrsqrt.pop %v57
    %v59 = vmul.f32 %v57, %v58
    %vm60 = vcmp.eq.f32.partialorder %v57, inf
    %v61 = vsel %vm60, %v57, %v59
    %vm62 = vcmp.eq.f32.partialorder %v57, 0.0
    %v63 = vand.u32 %v57, 2147483648
    %v64 = vsel %vm62, %v63, %v61
    %v65 = vmax.f32 %v64, 1e-12
    %v66 = vrcp.pop %v65
    %v67 = vmul.f32 %v52, %v66
    %v68 = vmul.f32 %v67, 10.0
    %v69 = vld [vmem:[#allocation4] sm:$0xff]
    %v70 = vmul.f32 %v69, %v69
    %v71 = vsel %vm54, %v70, 0.0
    %72 = vadd.xlane.f32.xlu0 %v71
    %v73 = vpop.xlane.xlu0 %72
    %v74 = vrsqrt.pop %v73
    %v75 = vmul.f32 %v73, %v74
    %vm76 = vcmp.eq.f32.partialorder %v73, inf
    %v77 = vsel %vm76, %v73, %v75
    %vm78 = vcmp.eq.f32.partialorder %v73, 0.0
    %v79 = vand.u32 %v73, 2147483648
    %v80 = vsel %vm78, %v79, %v77
    %v81 = vmax.f32 %v80, 1e-12
    %v82 = vrcp.pop %v81
    %v83 = vmul.f32 %v69, %v82
    %v84 = vmul.f32 %v68, %v83
    %v85 = vsel %vm54, %v84, 0.0
    %86 = vadd.xlane.f32.xlu0 %v85
    %v87 = vpop.xlane.xlu0 %86
    %v88 = vpack.c.bf16 %v68, %v68
    %v89 = vld [vmem:[#allocation6] sm:$0xf]
    %v90 = vld [vmem:[#allocation6 + $0x4] sm:$0xf]
    %v93 = vunpack.c.l.b16 %v89
    %v94 = vunpack.c.l.b16 %v90
    %v95 = vpack.c.b16 %v94, %v93
    %v97 = vsel %vm54, %v88, 0
    %v100 = vsel %vm54, %v95, 0
    %102 = vmatprep.subr.bf16.mxu0 0
    %103 = vmatpush1.bf16.xpose.msra.mxu0 %v100
    %104 = vmatprep.subr.bf16.mxu0 0
    %105 = vmatpush1.bf16.xpose.msra.mxu0 0
    %106 = vmatprep.subr.bf16.mxu0 0
    %107 = vmatpush1.bf16.xpose.msra.mxu0 0
    %108 = vmatprep.subr.bf16.mxu0 0
    %109 = vmatpush1.bf16.xpose.msra.mxu0 0
    %110 = vmatprep.subr.bf16.mxu0 0
    %111 = vmatpush1.bf16.xpose.msra.mxu0 0
    %112 = vmatprep.subr.bf16.mxu0 0
    %113 = vmatpush1.bf16.xpose.msra.mxu0 0
    %114 = vmatprep.subr.bf16.mxu0 0
    %115 = vmatpush1.bf16.xpose.msra.mxu0 0
    %116 = vmatprep.subr.bf16.mxu0 0
    %117 = vmatpush1.bf16.xpose.msra.mxu0 0
    %118 = vmatprep.subr.bf16.mxu0 0
    %119 = vmatpush1.bf16.xpose.msra.mxu0 0
    %120 = vmatprep.subr.bf16.mxu0 0
    %121 = vmatpush1.bf16.xpose.msra.mxu0 0
    %122 = vmatprep.subr.bf16.mxu0 0
    %123 = vmatpush1.bf16.xpose.msra.mxu0 0
    %124 = vmatprep.subr.bf16.mxu0 0
    %125 = vmatpush1.bf16.xpose.msra.mxu0 0
    %126 = vmatprep.subr.bf16.mxu0 0
    %127 = vmatpush1.bf16.xpose.msra.mxu0 0
    %128 = vmatprep.subr.bf16.mxu0 0
    %129 = vmatpush1.bf16.xpose.msra.mxu0 0
    %130 = vmatprep.subr.bf16.mxu0 0
    %131 = vmatpush1.bf16.xpose.msra.mxu0 0
    %132 = vmatprep.subr.bf16.mxu0 0
    %133 = vmatpush1.bf16.xpose.msra.mxu0 0
    %134 = vmatprep.mubr.bf16.mxu0 0
    %135 = vmatmul.mubr.bf16.gmra.mrb[0].mxu0 %v97
    %v136 = vpop.f32.mrb[0].mxu0
    %v137 = vadd.f32 0.0, %v136
    %v138 = vpop.f32.mrb[0].mxu0
    %v139 = vpop.f32.mrb[0].mxu0
    %v140 = vpop.f32.mrb[0].mxu0
    %141 = vdwg.mxu0
    %vm142 = vcmask 130048
    %v143 = vsel %vm142, %v137, -inf
    %144 = vmax.xlane.f32.xlu0 %v143
    %v145 = vpop.xlane.xlu0 %144
    %v146 = vmax.f32 %v87, %v145
    %v147 = vsub.f32 %v87, %v146
    %v148 = vmul.f32 %v147, 1.442695
    %v149 = vpow.pop %v148
    %v150 = vsub.f32 %v137, %v146
    %v151 = vmul.f32 %v150, 1.442695
    %v152 = vpow.pop %v151
    %v153 = vsel %vm142, %v152, 0.0
    %154 = vadd.xlane.f32.xlu0 %v153
    %v155 = vpop.xlane.xlu0 %154
    %v156 = vadd.f32 %v149, %v155
    %v157 = vlog2.pop %v156
    %v158 = vmul.f32 %v157, 0.6931472
    %v159 = vadd.f32 %v146, %v158
    %v160 = vsub.f32 %v159, %v87
    %vm161 = vcmask 7168
    %162 = vst.msk [vmem:[%s3] sm:$0xff] %vm161, %v160
    // Predicated region
    $region26: #{tpu_custom_call.1} parent=1 // pred_check
      _
    $region27: #{tpu_custom_call.1} parent=1 // pred_check_branch
      %164 = sbr.rel (0) target = $region29
    $region28: #{tpu_custom_call.1} parent=1 // pred_region
      _
    $region29: #{tpu_custom_call.1} parent=1 // pred_fallthru
      _
    // Predicated region
    $region30: #{tpu_custom_call.1} parent=1 // pred_check
      _
    $region31: #{tpu_custom_call.1} parent=1 // pred_check_branch
      %166 = sbr.rel (0) target = $region33
    $region32: #{tpu_custom_call.1} parent=1 // pred_region
      _
    $region33: #{tpu_custom_call.1} parent=1 // pred_fallthru
      _
    %167 = vsyncpa [#allocation3], 1
    %168 = vsyncpa [#allocation5], 1

</llo_original>
